<compile_context>
chip_gen: v7x
topology: tpu7x:2x2x1
jax: 0.10.0
libtpu: 0.0.40
codegen_flags: <defaults>
</compile_context>

<pallas_src>
import functools

import jax
import jax.numpy as jnp
from jax.experimental import pallas as pl
from jax.experimental.pallas import tpu as pltpu

EPS = 1e-5
# MXU input dtype for the big input-projection matmul (accumulation is always f32).
# bfloat16 is native MXU rate on v5e/v6e/v7x; set to jnp.float32 for bit-exact f32 math.
MXU_DTYPE = jnp.bfloat16


def _round_up(x, m):
    return (x + m - 1) // m * m


# ----------------------------- fused matmul (+ bias) kernel -----------------------------

def _matmul_bias_kernel(x_ref, w_ref, b_ref, o_ref):
    acc = jnp.dot(x_ref[...], w_ref[...], preferred_element_type=jnp.float32)
    o_ref[...] = acc + b_ref[...]


def fused_matmul(x, w, bias, *, tm=256, mxu_dtype=MXU_DTYPE):
    """out[M,N] = x[M,K] @ w[K,N] + bias[N].  Grid over M only; K and N stay whole.

    Eval-mode BatchNorm is expected to be pre-folded into w / bias by the caller, so the
    epilogue is a single bias add.
    """
    M, K = x.shape
    N = w.shape[1]
    tm_eff = min(tm, _round_up(M, 8))          # don't over-pad tiny demo shapes
    Mp = _round_up(M, tm_eff)
    if Mp != M:
        x = jnp.pad(x, ((0, Mp - M), (0, 0)))
    out = pl.pallas_call(
        _matmul_bias_kernel,
        out_shape=jax.ShapeDtypeStruct((Mp, N), jnp.float32),
        grid=(Mp // tm_eff,),
        in_specs=[
            pl.BlockSpec((tm_eff, K), lambda i: (i, 0)),
            pl.BlockSpec((K, N), lambda i: (0, 0)),
            pl.BlockSpec((1, N), lambda i: (0, 0)),
        ],
        out_specs=pl.BlockSpec((tm_eff, N), lambda i: (i, 0)),
        compiler_params=pltpu.CompilerParams(dimension_semantics=("parallel",)),
    )(x.astype(mxu_dtype), w.astype(mxu_dtype), bias.reshape(1, N).astype(jnp.float32))
    return out[:M]


# ----------------------------- LiGRU recurrence kernel -----------------------------

def _ligru_scan_kernel(w_ref, ua_ref, uz_ref, h0_ref, o_ref, h_scr, *, hidden, tt):
    # grid = (batch_blocks, T // tt); the time axis (axis 1) is sequential.
    @pl.when(pl.program_id(1) == 0)
    def _():
        h_scr[...] = h0_ref[...]

    h = h_scr[...]
    for k in range(tt):                        # static unroll over the time block
        at = w_ref[:, k, 0:hidden] + jnp.dot(
            h, ua_ref[...], preferred_element_type=jnp.float32)
        zt = jax.nn.sigmoid(w_ref[:, k, hidden:2 * hidden] + jnp.dot(
            h, uz_ref[...], preferred_element_type=jnp.float32))
        hcand = jnp.maximum(at, 0.0)           # ReLU nonlinearity; eval drop_mask == 1.0
        h = zt * h + (1.0 - zt) * hcand
        o_ref[:, k, :] = h
    h_scr[...] = h


def ligru_recurrence(w_seq, ua, uz, h0, *, tt=8, batch_blocks=1):
    """w_seq: [B, T, 2H] (already batch-normed), ua/uz: [H, H] = u.weight[:H].T / [H:].T,
    h0: [B, H]  ->  h_seq: [B, T, H].

    Time is blocked (tt steps per grid iteration) with the hidden state carried in VMEM
    scratch; BlockSpecs stride the time axis of the batch-major layout, so no transposes
    are materialized.  batch_blocks > 1 adds a leading "parallel" grid axis (useful on v7x
    to put independent sequences on the two TensorCores).
    """
    B, T, two_h = w_seq.shape
    H = two_h // 2
    tt = _round_up(tt, 8)                      # block time dim must be sublane-aligned
    Bp = _round_up(B, 8)                       # pad batch to full sublanes
    Tp = _round_up(T, tt)
    if (Bp, Tp) != (B, T):
        w_seq = jnp.pad(w_seq, ((0, Bp - B), (0, Tp - T), (0, 0)))
        h0 = jnp.pad(h0, ((0, Bp - B), (0, 0)))
    if batch_blocks < 1 or Bp % (batch_blocks * 8) != 0:
        batch_blocks = 1
    Bb = Bp // batch_blocks

    out = pl.pallas_call(
        functools.partial(_ligru_scan_kernel, hidden=H, tt=tt),
        out_shape=jax.ShapeDtypeStruct((Bp, Tp, H), jnp.float32),
        grid_spec=pltpu.PrefetchScalarGridSpec(
            num_scalar_prefetch=0,
            grid=(batch_blocks, Tp // tt),
            in_specs=[
                pl.BlockSpec((Bb, tt, two_h), lambda b, t: (b, t, 0)),
                pl.BlockSpec((H, H), lambda b, t: (0, 0)),
                pl.BlockSpec((H, H), lambda b, t: (0, 0)),
                pl.BlockSpec((Bb, H), lambda b, t: (b, 0)),
            ],
            out_specs=pl.BlockSpec((Bb, tt, H), lambda b, t: (b, t, 0)),
            scratch_shapes=[pltpu.VMEM((Bb, H), jnp.float32)],
        ),
        compiler_params=pltpu.CompilerParams(
            dimension_semantics=("parallel", "arbitrary")),
    )(w_seq, ua, uz, h0)
    return out[:B, :T, :]


# ----------------------------- LiGRU_Layer forward (eval mode) -----------------------------

def ligru_layer_forward(p, x, hx=None, *, tt=8, batch_blocks=1):
    """x: [batch, time, input_size] -> [batch, time, hidden * (2 if bidirectional else 1)]."""
    B, T, F = x.shape
    H = p["hidden"]
    if p["bidirectional"]:
        x = jnp.concatenate([x, x[:, ::-1, :]], axis=0)          # [2B, T, F]
    Bc = x.shape[0]

    # w = BatchNorm(self.w(x))  -- BN (eval, running stats) folded into weight/bias.
    w = fused_matmul(x.reshape(Bc * T, F), p["w_fold"], p["w_bias"])
    w = w.reshape(Bc, T, 2 * H)

    if hx is None:
        h0 = jnp.zeros((Bc, H), jnp.float32)                     # h_init buffer is zeros
    else:
        h0 = jnp.broadcast_to(hx.astype(jnp.float32), (Bc, H))

    h = ligru_recurrence(w, p["ua"], p["uz"], h0, tt=tt, batch_blocks=batch_blocks)

    if p["bidirectional"]:
        h = jnp.concatenate([h[:B], h[B:, ::-1, :]], axis=-1)    # [B, T, 2H]
    return h


# ----------------------------- parameters & pure-JAX reference -----------------------------

def make_raw_params(key, input_size, hidden):
    """Raw module-style parameters (Linear weights + BatchNorm1d eval statistics)."""
    k_w, k_u, k_g, k_b, k_m, k_v = jax.random.split(key, 6)
    W = jax.random.uniform(k_w, (2 * hidden, input_size), jnp.float32,
                           -1.0, 1.0) / jnp.sqrt(float(input_size))
    U = jax.random.uniform(k_u, (2 * hidden, hidden), jnp.float32,
                           -1.0, 1.0) / jnp.sqrt(float(hidden))
    gamma = 1.0 + 0.05 * jax.random.normal(k_g, (2 * hidden,), jnp.float32)
    beta = 0.05 * jax.random.normal(k_b, (2 * hidden,), jnp.float32)
    running_mean = 0.05 * jax.random.normal(k_m, (2 * hidden,), jnp.float32)
    running_var = 1.0 + 0.1 * jax.random.uniform(k_v, (2 * hidden,), jnp.float32)
    return dict(W=W, U=U, gamma=gamma, beta=beta,
                running_mean=running_mean, running_var=running_var)


def fold_params(raw, *, hidden, bidirectional):
    """Fold eval-mode BatchNorm1d into the input projection and split u into u_a / u_z."""
    s = raw["gamma"] / jnp.sqrt(raw["running_var"] + EPS)        # [2H]
    w_fold = raw["W"].T * s[None, :]                             # [F, 2H]
    w_bias = raw["beta"] - raw["running_mean"] * s               # [2H]
    ua = raw["U"][:hidden, :].T                                  # [H, H]
    uz = raw["U"][hidden:, :].T                                  # [H, H]
    return dict(w_fold=w_fold, w_bias=w_bias, ua=ua, uz=uz,
                hidden=hidden, bidirectional=bidirectional)


def ligru_layer_reference(p, x):
    """Pure-JAX eval-mode reference (mirrors the bf16 MXU cast of the input projection)."""
    B, T, F = x.shape
    H = p["hidden"]
    if p["bidirectional"]:
        x = jnp.concatenate([x, x[:, ::-1, :]], axis=0)
    Bc = x.shape[0]
    w = (jnp.dot(x.reshape(Bc * T, F).astype(MXU_DTYPE), p["w_fold"].astype(MXU_DTYPE),
                 preferred_element_type=jnp.float32)
         + p["w_bias"]).reshape(Bc, T, 2 * H)
    h = jnp.zeros((Bc, H), jnp.float32)
    hp = jax.lax.Precision.HIGHEST
    hs = []
    for k in range(T):
        at = w[:, k, :H] + jnp.dot(h, p["ua"], precision=hp)
        zt = jax.nn.sigmoid(w[:, k, H:] + jnp.dot(h, p["uz"], precision=hp))
        h = zt * h + (1.0 - zt) * jnp.maximum(at, 0.0)
        hs.append(h)
    hseq = jnp.stack(hs, axis=1)
    if p["bidirectional"]:
        hseq = jnp.concatenate([hseq[:B], hseq[B:, ::-1, :]], axis=-1)
    return hseq


if __name__ == "__main__":
    key = jax.random.PRNGKey(0)
    k_x, k_p = jax.random.split(key)

    # Small shapes consistent with the module (real TIMIT config uses input/hidden = 512).
    batch, seq_len, input_size, hidden = 2, 16, 32, 64
    x = jax.random.normal(k_x, (batch, seq_len, input_size), jnp.float32)

    raw = make_raw_params(k_p, input_size, hidden)
    params = fold_params(raw, hidden=hidden, bidirectional=True)

    out = jax.block_until_ready(ligru_layer_forward(params, x))
    assert out.shape == (batch, seq_len, 2 * hidden), out.shape
    assert bool(jnp.all(jnp.isfinite(out)))

    # Correctness vs. pure-JAX reference (expected diff ~1e-5; loose bound only covers
    # XLA-vs-Mosaic matmul accumulation/precision differences).
    ref = ligru_layer_reference(params, x)
    assert bool(jnp.allclose(out, ref, rtol=5e-2, atol=5e-2)), \
        float(jnp.max(jnp.abs(out - ref)))

    print("KERNEL_OK")
</pallas_src>

<mosaic_0001>
module attributes {stable_mosaic.version = 11 : i64} {
  func.func @_matmul_bias_kernel(%arg0: i32, %arg1: memref<64x32xbf16, #tpu.memory_space<vmem>>, %arg2: memref<32x128xbf16, #tpu.memory_space<vmem>>, %arg3: memref<1x128xf32, #tpu.memory_space<vmem>>, %arg4: memref<64x128xf32, #tpu.memory_space<vmem>>) attributes {dimension_semantics = [#tpu.dimension_semantics<parallel>], iteration_bounds = array<i64: 1>, scalar_prefetch = 0 : i64, scratch_operands = 0 : i64, tpu.core_type = #tpu.core_type<tc>, window_params = [{transform_indices = @transform_0, window_bounds = array<i64: 64, 32>}, {pipeline_mode = #tpu.pipeline_mode<synchronous>, transform_indices = @transform_1, window_bounds = array<i64: 32, 128>}, {pipeline_mode = #tpu.pipeline_mode<synchronous>, transform_indices = @transform_2, window_bounds = array<i64: 1, 128>}, {transform_indices = @transform_3, window_bounds = array<i64: 64, 128>}]} {
    %c0 = arith.constant 0 : index
    %c0_0 = arith.constant 0 : index
    %0 = vector.load %arg1[%c0, %c0_0] : memref<64x32xbf16, #tpu.memory_space<vmem>>, vector<64x32xbf16>
    %c0_1 = arith.constant 0 : index
    %c0_2 = arith.constant 0 : index
    %1 = vector.load %arg2[%c0_1, %c0_2] : memref<32x128xbf16, #tpu.memory_space<vmem>>, vector<32x128xbf16>
    %cst = arith.constant dense<0.000000e+00> : vector<64x128xf32>
    %2 = tpu.matmul %0, %1, %cst {dimension_numbers = #tpu.dot_dimension_numbers<[1], [0], [0], [1], [0, 0, 1, 1], [], []>} : vector<64x32xbf16>, vector<32x128xbf16>, vector<64x128xf32> -> vector<64x128xf32>
    %c0_3 = arith.constant 0 : index
    %c0_4 = arith.constant 0 : index
    %3 = vector.load %arg3[%c0_3, %c0_4] : memref<1x128xf32, #tpu.memory_space<vmem>>, vector<1x128xf32>
    %4 = vector.broadcast %3 : vector<1x128xf32> to vector<64x128xf32>
    %5 = arith.addf %2, %4 : vector<64x128xf32>
    %c0_5 = arith.constant 0 : index
    %c0_6 = arith.constant 0 : index
    %6 = vector.load %arg4[%c0_5, %c0_6] : memref<64x128xf32, #tpu.memory_space<vmem>>, vector<64x128xf32>
    tpu.vector_store %arg4[%c0_5, %c0_6], %5 {strides = array<i32>} : memref<64x128xf32, #tpu.memory_space<vmem>>, vector<64x128xf32>,
    return
  }
  func.func @transform_0(%arg0: i32) -> (i32, i32) {
    %c0_i32 = arith.constant 0 : i32
    %c0_i32_0 = arith.constant 0 : i32
    return %arg0, %c0_i32 : i32, i32
  }
  func.func @transform_1(%arg0: i32) -> (i32, i32) {
    %c0_i32 = arith.constant 0 : i32
    %c0_i32_0 = arith.constant 0 : i32
    %c0_i32_1 = arith.constant 0 : i32
    return %c0_i32, %c0_i32_0 : i32, i32
  }
  func.func @transform_2(%arg0: i32) -> (i32, i32) {
    %c0_i32 = arith.constant 0 : i32
    %c0_i32_0 = arith.constant 0 : i32
    %c0_i32_1 = arith.constant 0 : i32
    return %c0_i32, %c0_i32_0 : i32, i32
  }
  func.func @transform_3(%arg0: i32) -> (i32, i32) {
    %c0_i32 = arith.constant 0 : i32
    %c0_i32_0 = arith.constant 0 : i32
    return %arg0, %c0_i32 : i32, i32
  }
}

</mosaic_0001>

<llo_original>
// kernel: tpu_custom_call.1
$region0: #{tpu_custom_call.1}
  #allocation0 [shape = 'u32[]', space=smem, size = 0x4, offset = 0x4, fixed_abs, tag = 'smem constant byte address 0x4 - core index']
  #allocation1 [shape = 'u32[144,128]{1,0:T(1,128)}', space=vmem, size = 0x12000, scoped, tag = 'internal scratch']
  %s0 = inlined_call_operand.vmem [shape: bf16[64,32], index: 0, kind: input, shape index: {}]
  %s1 = inlined_call_operand.vmem [shape: bf16[32,128], index: 1, kind: input, shape index: {}]
  %s2 = inlined_call_operand.vmem [shape: f32[1,128], index: 2, kind: input, shape index: {}]
  %s3 = inlined_call_operand.hbm [shape: f32[64,128], index: 3, kind: output, shape index: {}]
  %s4 = sld [smem:[#allocation0]]
  $region22: #{tpu_custom_call.1} parent=0
    _
  %s6 = ssub.s32 1, %s4
  %s7 = scalar_select 0, %s6, %s4
  $region1: #{tpu_custom_call.1} parent=0
    #allocation2 [shape = 'u8[32768]{0}', space=vmem, size = 0x8000, scoped, tag = 'output window, operand 0, single buffered']
    #allocation3 [shape = 's32[1]{0}', space=sflag, size = 0x4, scoped, tag = 'scoped memory for tpu_custom_call.1']
    %8 = vsyncpa [#allocation3], 0
    // Predicated region
    $region2: #{tpu_custom_call.1} parent=1 // pred_check
      _
    $region3: #{tpu_custom_call.1} parent=1 // pred_check_branch
      %10 = sbr.rel (0) target = $region5
    $region4: #{tpu_custom_call.1} parent=1 // pred_region
      _
    $region5: #{tpu_custom_call.1} parent=1 // pred_fallthru
      _
    // Predicated region
    $region6: #{tpu_custom_call.1} parent=1 // pred_check
      _
    $region7: #{tpu_custom_call.1} parent=1 // pred_check_branch
      %12 = sbr.rel (0) target = $region9
    $region8: #{tpu_custom_call.1} parent=1 // pred_region
      _
    $region9: #{tpu_custom_call.1} parent=1 // pred_fallthru
      _
    // Predicated region
    $region10: #{tpu_custom_call.1} parent=1 // pred_check
      _
    $region11: #{tpu_custom_call.1} parent=1 // pred_check_branch
      %14 = sbr.rel (0) target = $region13
    $region12: #{tpu_custom_call.1} parent=1 // pred_region
      _
    $region13: #{tpu_custom_call.1} parent=1 // pred_fallthru
      _
    %v16 = vld [vmem:[%s0] sm:$0xf]
    %v17 = vld [vmem:[%s0 + $0x4] sm:$0xf]
    %v18 = vld [vmem:[%s0 + $0x8] sm:$0xf]
    %v19 = vld [vmem:[%s0 + $0xc] sm:$0xf]
    %v20 = vld [vmem:[%s0 + $0x10] sm:$0xf]
    %v21 = vld [vmem:[%s0 + $0x14] sm:$0xf]
    %v22 = vld [vmem:[%s0 + $0x18] sm:$0xf]
    %v23 = vld [vmem:[%s0 + $0x1c] sm:$0xf]
    %v24 = vld [vmem:[%s1] sm:$0xf]
    %v25 = vld [vmem:[%s1 + $0x4] sm:$0xf]
    %v26 = vld [vmem:[%s1 + $0x8] sm:$0xf]
    %v27 = vld [vmem:[%s1 + $0xc] sm:$0xf]
    %v28 = vld [vmem:[%s2] sm:$0x1]
    %v30 = vlaneseq
    %v31 = vshrl.u32 %v30, 7
    %v32 = vsub.s32 0, %v31
    %v33 = vrot.slane %v28, %v32
    %v43 = vunpack.c.l.b16 %v16
    %v44 = vunpack.c.l.b16 %v17
    %v45 = vunpack.c.l.b16 %v18
    %v46 = vunpack.c.l.b16 %v19
    %v47 = vunpack.c.l.b16 %v20
    %v48 = vunpack.c.l.b16 %v21
    %v49 = vunpack.c.l.b16 %v22
    %v50 = vunpack.c.l.b16 %v23
    %v51 = vpack.c.b16 %v44, %v43
    %v52 = vpack.c.b16 %v46, %v45
    %v53 = vpack.c.b16 %v48, %v47
    %v54 = vpack.c.b16 %v50, %v49
    %v59 = vunpack.c.l.b16 %v24
    %v60 = vunpack.c.l.b16 %v25
    %v61 = vunpack.c.l.b16 %v26
    %v62 = vunpack.c.l.b16 %v27
    %v63 = vpack.c.b16 %v60, %v59
    %v64 = vpack.c.b16 %v62, %v61
    %vm67 = vcmask 261120
    %v69 = vsel %vm67, %v51, 0
    %v72 = vsel %vm67, %v52, 0
    %v75 = vsel %vm67, %v53, 0
    %v78 = vsel %vm67, %v54, 0
    %80 = vmatprep.subr.bf16.mxu0 0
    %81 = vmatpush1.bf16.msra.mxu0 %v63
    %82 = vmatprep.subr.bf16.mxu0 0
    %83 = vmatpush1.bf16.msra.mxu0 %v64
    %84 = vmatprep.subr.bf16.mxu0 0
    %85 = vmatpush1.bf16.msra.mxu0 0
    %86 = vmatprep.subr.bf16.mxu0 0
    %87 = vmatpush1.bf16.msra.mxu0 0
    %88 = vmatprep.subr.bf16.mxu0 0
    %89 = vmatpush1.bf16.msra.mxu0 0
    %90 = vmatprep.subr.bf16.mxu0 0
    %91 = vmatpush1.bf16.msra.mxu0 0
    %92 = vmatprep.subr.bf16.mxu0 0
    %93 = vmatpush1.bf16.msra.mxu0 0
    %94 = vmatprep.subr.bf16.mxu0 0
    %95 = vmatpush1.bf16.msra.mxu0 0
    %96 = vmatprep.subr.bf16.mxu0 0
    %97 = vmatpush1.bf16.msra.mxu0 0
    %98 = vmatprep.subr.bf16.mxu0 0
    %99 = vmatpush1.bf16.msra.mxu0 0
    %100 = vmatprep.subr.bf16.mxu0 0
    %101 = vmatpush1.bf16.msra.mxu0 0
    %102 = vmatprep.subr.bf16.mxu0 0
    %103 = vmatpush1.bf16.msra.mxu0 0
    %104 = vmatprep.subr.bf16.mxu0 0
    %105 = vmatpush1.bf16.msra.mxu0 0
    %106 = vmatprep.subr.bf16.mxu0 0
    %107 = vmatpush1.bf16.msra.mxu0 0
    %108 = vmatprep.subr.bf16.mxu0 0
    %109 = vmatpush1.bf16.msra.mxu0 0
    %110 = vmatprep.subr.bf16.mxu0 0
    %111 = vmatpush1.bf16.msra.mxu0 0
    %112 = vmatprep.mubr.bf16.mxu0 0
    %113 = vmatmul.mubr.bf16.gmra.mrb[0].mxu0 %v69
    %v114 = vpop.f32.mrb[0].mxu0
    %v115 = vadd.f32 %v33, %v114
    %v116 = vpop.f32.mrb[0].mxu0
    %v117 = vpop.f32.mrb[0].mxu0
    %v118 = vadd.f32 %v33, %v117
    %v119 = vpop.f32.mrb[0].mxu0
    %120 = vmatprep.mubr.bf16.mxu0 0
    %121 = vmatmul.mubr.bf16.gmra.mrb[0].mxu0 %v72
    %v122 = vpop.f32.mrb[0].mxu0
    %v123 = vadd.f32 %v33, %v122
    %v124 = vpop.f32.mrb[0].mxu0
    %v125 = vpop.f32.mrb[0].mxu0
    %v126 = vadd.f32 %v33, %v125
    %v127 = vpop.f32.mrb[0].mxu0
    %128 = vmatprep.mubr.bf16.mxu0 0
    %129 = vmatmul.mubr.bf16.gmra.mrb[0].mxu0 %v75
    %v130 = vpop.f32.mrb[0].mxu0
    %v131 = vadd.f32 %v33, %v130
    %v132 = vpop.f32.mrb[0].mxu0
    %v133 = vpop.f32.mrb[0].mxu0
    %v134 = vadd.f32 %v33, %v133
    %v135 = vpop.f32.mrb[0].mxu0
    %136 = vmatprep.mubr.bf16.mxu0 0
    %137 = vmatmul.mubr.bf16.gmra.mrb[0].mxu0 %v78
    %v138 = vpop.f32.mrb[0].mxu0
    %v139 = vadd.f32 %v33, %v138
    %v140 = vpop.f32.mrb[0].mxu0
    %v141 = vpop.f32.mrb[0].mxu0
    %v142 = vadd.f32 %v33, %v141
    %v143 = vpop.f32.mrb[0].mxu0
    %144 = vdwg.mxu0
    %145 = vst [vmem:[#allocation2] sm:$0xff] %v115
    %146 = vst [vmem:[#allocation2 + $0x8] sm:$0xff] %v118
    %147 = vst [vmem:[#allocation2 + $0x10] sm:$0xff] %v123
    %148 = vst [vmem:[#allocation2 + $0x18] sm:$0xff] %v126
    %149 = vst [vmem:[#allocation2 + $0x20] sm:$0xff] %v131
    %150 = vst [vmem:[#allocation2 + $0x28] sm:$0xff] %v134
    %151 = vst [vmem:[#allocation2 + $0x30] sm:$0xff] %v139
    %152 = vst [vmem:[#allocation2 + $0x38] sm:$0xff] %v142
    // Predicated region
    $region14: #{tpu_custom_call.1} parent=1 // pred_check
      _
    $region15: #{tpu_custom_call.1} parent=1 // pred_check_branch
      %154 = sbr.rel (0) target = $region17
    $region16: #{tpu_custom_call.1} parent=1 // pred_region
      %s156 = ssub.s32 1024, 1024
      %157 = vsyncadd [#allocation3], %s156
      %s158 = sshll.u32 [#allocation2], 4
      %s159 = int_to_ptr.vmem [resolvable:$true] %s158
      %164 = dma.vmem_to_hbm [thread:$0]  %s159, 1024, %s3, [#allocation3], 128, 128, 8
    $region17: #{tpu_custom_call.1} parent=1 // pred_fallthru
      _
    // Predicated region
    $region18: #{tpu_custom_call.1} parent=1 // pred_check
      _
    $region19: #{tpu_custom_call.1} parent=1 // pred_check_branch
      %166 = sbr.rel (0) target = $region21
    $region20: #{tpu_custom_call.1} parent=1 // pred_region
      %167 = dma.done [#allocation3], 1024
    $region21: #{tpu_custom_call.1} parent=1 // pred_fallthru
      _
    %168 = vsyncpa [#allocation3], 1

</llo_original>
